<compile_context>
chip_gen: v5e
topology: v5e:2x2
jax: 0.10.0
libtpu: 0.0.40
codegen_flags: <defaults>
</compile_context>

<pallas_src>
import functools
import math

import jax
import jax.numpy as jnp
from jax.experimental import pallas as pl
from jax.experimental.pallas import tpu as pltpu


def _round_up(x: int, m: int) -> int:
    return ((x + m - 1) // m) * m


def _vmem_capacity_bytes() -> int:
    try:
        return int(pltpu.get_tpu_info().vmem_capacity_bytes)
    except Exception:
        return 64 * 1024 * 1024  # conservative fallback (v7x: 64 MiB / TC)


def _vmem_usage_bytes(tm, tn, d_model, x_it, w_it, out_it) -> int:
    """Actual VMEM residency: Pallas double-buffers every in/out block."""
    return (2 * tm * d_model * x_it        # x row tile (resident across p, j)
            + 2 * d_model * tn * w_it      # streamed W tile
            + 2 * tn * w_it                # streamed bias tile
            + 2 * tm * tn * out_it         # streamed output tile
            + 2 * tm * 4)                  # running max / sum-exp scratch


def _choose_tiles(M, d_model, vocab, x_it, w_it, out_it, vmem_budget):
    """MXU-friendly tiles that fit the VMEM budget (incl. double buffers)."""
    vocab_pad = _round_up(vocab, 128)
    tn = min(2048, vocab_pad)
    if tn >= 512:
        tn = (tn // 256) * 256             # multiples of 256 for 2x256^2 MXUs
    tm = min(256, _round_up(M, 8))

    # Give the "parallel" row axis >= 2 tiles so both TensorCores get work
    # (v7x megacore), as long as each tile stays reasonably large.
    if pl.cdiv(M, tm) < 2 and M >= 128:
        tm = max(64, _round_up((M + 1) // 2, 8))

    def usage(tm_, tn_):
        return _vmem_usage_bytes(tm_, tn_, d_model, x_it, w_it, out_it)

    while tn > 512 and usage(tm, tn) > vmem_budget:
        tn = max(512, (tn // 2 // 256) * 256)
    while tm > 64 and usage(tm, tn) > vmem_budget:
        tm = max(64, (tm // 2 // 8) * 8)
    while tn > 128 and usage(tm, tn) > vmem_budget:
        tn = max(128, (tn // 2 // 128) * 128)
    while tm > 8 and usage(tm, tn) > vmem_budget:
        tm = max(8, (tm // 2 // 8) * 8)
    return tm, tn


def _proj_logsoftmax_kernel(x_ref, w_ref, b_ref, o_ref, m_sc, l_sc,
                            *, vocab: int, tn: int):
    p = pl.program_id(1)     # 0: LSE statistics pass, 1: normalize/write pass
    j = pl.program_id(2)     # vocab tile index
    nj = pl.num_programs(2)

    @pl.when((p == 0) & (j == 0))
    def _init():
        m_sc[...] = jnp.full_like(m_sc, -jnp.inf)
        l_sc[...] = jnp.zeros_like(l_sc)

    # (tm, tn) logits chunk on the MXU with f32 accumulation.
    logits = jnp.dot(x_ref[...], w_ref[...], preferred_element_type=jnp.float32)
    logits = logits + b_ref[...].astype(jnp.float32)

    def update_stats(chunk):
        # Online (flash-style) running max / sum-exp.  exp/log hit the EUP.
        m_prev = m_sc[...]
        m_new = jnp.maximum(m_prev, jnp.max(chunk, axis=-1, keepdims=True))
        l_sc[...] = (l_sc[...] * jnp.exp(m_prev - m_new)
                     + jnp.sum(jnp.exp(chunk - m_new), axis=-1, keepdims=True))
        m_sc[...] = m_new

    if vocab % tn != 0:
        # Padding columns only exist in the LAST vocab tile; only mask there,
        # and mask BEFORE the max/sum-exp update.
        @pl.when((p == 0) & (j < nj - 1))
        def _stats_dense():
            update_stats(logits)

        @pl.when((p == 0) & (j == nj - 1))
        def _stats_masked():
            col = jax.lax.broadcasted_iota(jnp.int32, logits.shape, 1)
            update_stats(jnp.where(col < vocab - j * tn, logits, -jnp.inf))
    else:
        @pl.when(p == 0)
        def _stats():
            update_stats(logits)

    @pl.when(p == 1)
    def _write():
        lse = m_sc[...] + jnp.log(l_sc[...])
        # Padded columns (if any) hold garbage here, but partial output
        # blocks only flush their in-bounds region to HBM.
        o_ref[...] = (logits - lse).astype(o_ref.dtype)


@functools.partial(jax.jit, static_argnames=("tm", "tn", "compute_dtype",
                                             "out_dtype", "vmem_limit"))
def _projection_layer_impl(x, w, b, *, tm, tn, compute_dtype, out_dtype,
                           vmem_limit):
    B, S, d_model = x.shape
    vocab = w.shape[1]
    M = B * S

    x2d = x.reshape(M, d_model)
    if compute_dtype is not None:
        # x is small; casting it here is cheap.  W is deliberately NOT cast
        # here -- store the weight persistently in the compute dtype instead
        # (avoids a full extra HBM pass over W on every call).
        x2d = x2d.astype(compute_dtype)
    b2d = b.reshape(1, vocab)

    grid = (pl.cdiv(M, tm), 2, pl.cdiv(vocab, tn))
    kernel = functools.partial(_proj_logsoftmax_kernel, vocab=vocab, tn=tn)

    out2d = pl.pallas_call(
        kernel,
        out_shape=jax.ShapeDtypeStruct((M, vocab), out_dtype),
        grid_spec=pltpu.PrefetchScalarGridSpec(
            num_scalar_prefetch=0,
            grid=grid,
            in_specs=[
                # x row tile: resident across the pass and vocab axes.
                pl.BlockSpec((tm, d_model), lambda i, p, j: (i, 0)),
                # Streamed W tile (re-streamed for the recompute pass).
                pl.BlockSpec((d_model, tn), lambda i, p, j: (0, j)),
                # Streamed bias tile.
                pl.BlockSpec((1, tn), lambda i, p, j: (0, j)),
            ],
            # Pass 0 parks on block (i, 0) (never written, never flushed
            # early); pass 1 streams lane-dense (tm, tn) blocks (i, j), each
            # written exactly once.
            out_specs=pl.BlockSpec((tm, tn), lambda i, p, j: (i, j * p)),
            scratch_shapes=[
                pltpu.VMEM((tm, 1), jnp.float32),   # running max
                pltpu.VMEM((tm, 1), jnp.float32),   # running sum-exp
            ],
        ),
        compiler_params=pltpu.CompilerParams(
            dimension_semantics=("parallel", "arbitrary", "arbitrary"),
            vmem_limit_bytes=vmem_limit,
        ),
    )(x2d, w, b2d)

    return out2d.reshape(B, S, vocab)


def projection_layer(x, w, b, *, tm=None, tn=None, compute_dtype=None,
                     out_dtype=None):
    """x: (B, S, d_model), w: (d_model, vocab), b: (vocab,) -> (B, S, vocab) log-probs.

    For the bf16 MXU path, store `w` persistently in bf16 and pass
    compute_dtype=jnp.bfloat16 (x is cast in-call; W is not).
    """
    B, S, d_model = x.shape
    vocab = w.shape[1]
    M = B * S

    x_it = jnp.dtype(compute_dtype if compute_dtype is not None else x.dtype).itemsize
    w_it = jnp.dtype(w.dtype).itemsize
    out_dt = jnp.dtype(out_dtype) if out_dtype is not None else jnp.dtype(x.dtype)
    out_it = out_dt.itemsize

    cap = _vmem_capacity_bytes()
    auto_tm, auto_tn = _choose_tiles(M, d_model, vocab, x_it, w_it, out_it,
                                     int(0.75 * cap))
    tm = auto_tm if tm is None else tm
    tn = auto_tn if tn is None else tn

    usage = _vmem_usage_bytes(tm, tn, d_model, x_it, w_it, out_it)
    vmem_limit = int(min(0.95 * cap, max(1.5 * usage, 20 * 2 ** 20)))

    return _projection_layer_impl(x, w, b, tm=tm, tn=tn,
                                  compute_dtype=compute_dtype,
                                  out_dtype=out_dt, vmem_limit=vmem_limit)


def init_params(key, d_model, vocab_size, dtype=jnp.float32):
    # Match nn.Linear default init: U(-1/sqrt(fan_in), 1/sqrt(fan_in)).
    kw, kb = jax.random.split(key)
    bound = 1.0 / math.sqrt(d_model)
    # PyTorch weight is (vocab, d_model); we store the transpose (d_model, vocab).
    w = jax.random.uniform(kw, (d_model, vocab_size), dtype, -bound, bound)
    b = jax.random.uniform(kb, (vocab_size,), dtype, -bound, bound)
    return w, b


if __name__ == "__main__":
    key = jax.random.PRNGKey(0)
    kx, kp, kx2 = jax.random.split(key, 3)

    # Small shapes consistent with the module.
    batch, seq, d_model, vocab_size = 2, 8, 32, 128
    x = jax.random.normal(kx, (batch, seq, d_model), jnp.float32)
    w, b = init_params(kp, d_model, vocab_size)

    # f32 path: must match the pure-JAX reference tightly.
    out = projection_layer(x, w, b)
    jax.block_until_ready(out)
    ref = jax.nn.log_softmax(x @ w + b, axis=-1)
    assert out.shape == (batch, seq, vocab_size)
    assert jnp.allclose(out, ref, atol=1e-5, rtol=1e-5), \
        float(jnp.max(jnp.abs(out - ref)))

    # Multi-tile + padded-vocab path: force small tiles so the grid has
    # several row tiles and several vocab tiles with a partial last tile.
    b2n, s2n, v2n = 5, 8, 250
    x2 = jax.random.normal(kx2, (b2n, s2n, d_model), jnp.float32)
    w2, bias2 = init_params(kp, d_model, v2n)
    out2 = projection_layer(x2, w2, bias2, tm=16, tn=128)
    jax.block_until_ready(out2)
    ref2 = jax.nn.log_softmax(x2 @ w2 + bias2, axis=-1)
    assert out2.shape == (b2n, s2n, v2n)
    assert jnp.allclose(out2, ref2, atol=1e-5, rtol=1e-5), \
        float(jnp.max(jnp.abs(out2 - ref2)))

    # bf16 MXU path: weights stored persistently in bf16 (no in-call W cast),
    # f32 accumulation + f32 softmax stats.  Loose smoke check.
    w_bf16 = w.astype(jnp.bfloat16)
    out_bf = projection_layer(x, w_bf16, b, compute_dtype=jnp.bfloat16)
    jax.block_until_ready(out_bf)
    assert jnp.allclose(out_bf, ref, atol=5e-2, rtol=0), \
        float(jnp.max(jnp.abs(out_bf - ref)))

    print("KERNEL_OK")
</pallas_src>

<mosaic_0001>
module attributes {stable_mosaic.version = 11 : i64} {
  func.func @_proj_logsoftmax_kernel(%arg0: i32, %arg1: i32, %arg2: i32, %arg3: memref<16x32xf32, #tpu.memory_space<vmem>>, %arg4: memref<32x128xf32, #tpu.memory_space<vmem>>, %arg5: memref<1x128xf32, #tpu.memory_space<vmem>>, %arg6: memref<16x128xf32, #tpu.memory_space<vmem>>, %arg7: memref<16x1xf32, #tpu.memory_space<vmem>>, %arg8: memref<16x1xf32, #tpu.memory_space<vmem>>) attributes {dimension_semantics = [#tpu.dimension_semantics<parallel>, #tpu.dimension_semantics<arbitrary>, #tpu.dimension_semantics<arbitrary>], iteration_bounds = array<i64: 1, 2, 1>, scalar_prefetch = 0 : i64, scratch_operands = 2 : i64, tpu.core_type = #tpu.core_type<tc>, window_params = [{transform_indices = @transform_0, window_bounds = array<i64: 16, 32>}, {transform_indices = @transform_1, window_bounds = array<i64: 32, 128>}, {transform_indices = @transform_2, window_bounds = array<i64: 1, 128>}, {transform_indices = @transform_3, window_bounds = array<i64: 16, 128>}]} {
    %c0_i32 = arith.constant 0 : i32
    %0 = arith.cmpi eq, %arg1, %c0_i32 : i32
    %c0_i32_0 = arith.constant 0 : i32
    %1 = arith.cmpi eq, %arg2, %c0_i32_0 : i32
    %2 = arith.andi %0, %1 : i1
    %3 = arith.extui %2 : i1 to i32
    %c0_i32_1 = arith.constant 0 : i32
    %4 = arith.cmpi ne, %3, %c0_i32_1 : i32
    scf.if %4 {
      %cst_10 = arith.constant 0xFF800000 : f32
      %17 = vector.broadcast %cst_10 : f32 to vector<16x1xf32>
      %c0_11 = arith.constant 0 : index
      %c0_12 = arith.constant 0 : index
      %18 = vector.load %arg7[%c0_11, %c0_12] : memref<16x1xf32, #tpu.memory_space<vmem>>, vector<16x1xf32>
      tpu.vector_store %arg7[%c0_11, %c0_12], %17 {strides = array<i32>} : memref<16x1xf32, #tpu.memory_space<vmem>>, vector<16x1xf32>,
      %cst_13 = arith.constant 0.000000e+00 : f32
      %19 = vector.broadcast %cst_13 : f32 to vector<16x1xf32>
      %c0_14 = arith.constant 0 : index
      %c0_15 = arith.constant 0 : index
      %20 = vector.load %arg8[%c0_14, %c0_15] : memref<16x1xf32, #tpu.memory_space<vmem>>, vector<16x1xf32>
      tpu.vector_store %arg8[%c0_14, %c0_15], %19 {strides = array<i32>} : memref<16x1xf32, #tpu.memory_space<vmem>>, vector<16x1xf32>,
    } else {
    }
    %c0 = arith.constant 0 : index
    %c0_2 = arith.constant 0 : index
    %5 = vector.load %arg3[%c0, %c0_2] : memref<16x32xf32, #tpu.memory_space<vmem>>, vector<16x32xf32>
    %c0_3 = arith.constant 0 : index
    %c0_4 = arith.constant 0 : index
    %6 = vector.load %arg4[%c0_3, %c0_4] : memref<32x128xf32, #tpu.memory_space<vmem>>, vector<32x128xf32>
    %cst = arith.constant dense<0.000000e+00> : vector<16x128xf32>
    %7 = tpu.matmul %5, %6, %cst {dimension_numbers = #tpu.dot_dimension_numbers<[1], [0], [0], [1], [0, 0, 1, 1], [], []>} : vector<16x32xf32>, vector<32x128xf32>, vector<16x128xf32> -> vector<16x128xf32>
    %c0_5 = arith.constant 0 : index
    %c0_6 = arith.constant 0 : index
    %8 = vector.load %arg5[%c0_5, %c0_6] : memref<1x128xf32, #tpu.memory_space<vmem>>, vector<1x128xf32>
    %9 = vector.broadcast %8 : vector<1x128xf32> to vector<16x128xf32>
    %10 = arith.addf %7, %9 : vector<16x128xf32>
    %c0_i32_7 = arith.constant 0 : i32
    %11 = arith.cmpi eq, %arg1, %c0_i32_7 : i32
    %12 = arith.extui %11 : i1 to i32
    %c0_i32_8 = arith.constant 0 : i32
    %13 = arith.cmpi ne, %12, %c0_i32_8 : i32
    scf.if %13 {
      %c0_10 = arith.constant 0 : index
      %c0_11 = arith.constant 0 : index
      %17 = vector.load %arg7[%c0_10, %c0_11] : memref<16x1xf32, #tpu.memory_space<vmem>>, vector<16x1xf32>
      %cst_12 = arith.constant dense<0xFF800000> : vector<16xf32>
      %18 = vector.multi_reduction <maximumf>, %10, %cst_12 [1] : vector<16x128xf32> to vector<16xf32>
      %19 = vector.shape_cast %18 : vector<16xf32> to vector<16x1xf32>
      %20 = arith.maximumf %17, %19 : vector<16x1xf32>
      %c0_13 = arith.constant 0 : index
      %c0_14 = arith.constant 0 : index
      %21 = vector.load %arg8[%c0_13, %c0_14] : memref<16x1xf32, #tpu.memory_space<vmem>>, vector<16x1xf32>
      %22 = arith.subf %17, %20 : vector<16x1xf32>
      %23 = math.exp %22 : vector<16x1xf32>
      %24 = arith.mulf %21, %23 : vector<16x1xf32>
      %25 = vector.broadcast %20 : vector<16x1xf32> to vector<16x128xf32>
      %26 = arith.subf %10, %25 : vector<16x128xf32>
      %27 = math.exp %26 : vector<16x128xf32>
      %cst_15 = arith.constant dense<0.000000e+00> : vector<16xf32>
      %28 = vector.multi_reduction <add>, %27, %cst_15 [1] : vector<16x128xf32> to vector<16xf32>
      %29 = vector.shape_cast %28 : vector<16xf32> to vector<16x1xf32>
      %30 = arith.addf %24, %29 : vector<16x1xf32>
      %c0_16 = arith.constant 0 : index
      %c0_17 = arith.constant 0 : index
      %31 = vector.load %arg8[%c0_16, %c0_17] : memref<16x1xf32, #tpu.memory_space<vmem>>, vector<16x1xf32>
      tpu.vector_store %arg8[%c0_16, %c0_17], %30 {strides = array<i32>} : memref<16x1xf32, #tpu.memory_space<vmem>>, vector<16x1xf32>,
      %c0_18 = arith.constant 0 : index
      %c0_19 = arith.constant 0 : index
      %32 = vector.load %arg7[%c0_18, %c0_19] : memref<16x1xf32, #tpu.memory_space<vmem>>, vector<16x1xf32>
      tpu.vector_store %arg7[%c0_18, %c0_19], %20 {strides = array<i32>} : memref<16x1xf32, #tpu.memory_space<vmem>>, vector<16x1xf32>,
    } else {
    }
    %c1_i32 = arith.constant 1 : i32
    %14 = arith.cmpi eq, %arg1, %c1_i32 : i32
    %15 = arith.extui %14 : i1 to i32
    %c0_i32_9 = arith.constant 0 : i32
    %16 = arith.cmpi ne, %15, %c0_i32_9 : i32
    scf.if %16 {
      %c0_10 = arith.constant 0 : index
      %c0_11 = arith.constant 0 : index
      %17 = vector.load %arg7[%c0_10, %c0_11] : memref<16x1xf32, #tpu.memory_space<vmem>>, vector<16x1xf32>
      %c0_12 = arith.constant 0 : index
      %c0_13 = arith.constant 0 : index
      %18 = vector.load %arg8[%c0_12, %c0_13] : memref<16x1xf32, #tpu.memory_space<vmem>>, vector<16x1xf32>
      %19 = math.log %18 : vector<16x1xf32>
      %20 = arith.addf %17, %19 : vector<16x1xf32>
      %21 = vector.broadcast %20 : vector<16x1xf32> to vector<16x128xf32>
      %22 = arith.subf %10, %21 : vector<16x128xf32>
      %c0_14 = arith.constant 0 : index
      %c0_15 = arith.constant 0 : index
      %23 = vector.load %arg6[%c0_14, %c0_15] : memref<16x128xf32, #tpu.memory_space<vmem>>, vector<16x128xf32>
      tpu.vector_store %arg6[%c0_14, %c0_15], %22 {strides = array<i32>} : memref<16x128xf32, #tpu.memory_space<vmem>>, vector<16x128xf32>,
    } else {
    }
    return
  }
  func.func @transform_0(%arg0: i32, %arg1: i32, %arg2: i32) -> (i32, i32) {
    %c0_i32 = arith.constant 0 : i32
    %c0_i32_0 = arith.constant 0 : i32
    return %arg0, %c0_i32 : i32, i32
  }
  func.func @transform_1(%arg0: i32, %arg1: i32, %arg2: i32) -> (i32, i32) {
    %c0_i32 = arith.constant 0 : i32
    %c0_i32_0 = arith.constant 0 : i32
    return %c0_i32, %arg2 : i32, i32
  }
  func.func @transform_2(%arg0: i32, %arg1: i32, %arg2: i32) -> (i32, i32) {
    %c0_i32 = arith.constant 0 : i32
    %c0_i32_0 = arith.constant 0 : i32
    return %c0_i32, %arg2 : i32, i32
  }
  func.func @transform_3(%arg0: i32, %arg1: i32, %arg2: i32) -> (i32, i32) {
    %0 = arith.muli %arg2, %arg1 : i32
    %c0_i32 = arith.constant 0 : i32
    return %arg0, %0 : i32, i32
  }
}

</mosaic_0001>

<llo_original>
// kernel: _projection_layer_impl.1
$region0: #{_projection_layer_impl.1}
  #allocation0 [shape = 'u32[]', space=smem, size = 0x4, offset = 0x4, fixed_abs, tag = 'smem constant byte address 0x4 - core index']
  #allocation1 [shape = 'u32[72,128]{1,0:T(1,128)}', space=vmem, size = 0x9000, scoped, tag = 'internal scratch']
  #allocation2 [shape = 'f32[16,1]{1,0:T(8,128)}', space=vmem, size = 0x2000, scoped, tag = 'scratch operand']
  #allocation3 [shape = 'f32[16,1]{1,0:T(8,128)}', space=vmem, size = 0x2000, scoped, tag = 'scratch operand']
  %s0 = inlined_call_operand.hbm [shape: f32[16,32], index: 0, kind: input, shape index: {}]
  %s1 = inlined_call_operand.hbm [shape: f32[32,128], index: 1, kind: input, shape index: {}]
  %s2 = inlined_call_operand.vmem [shape: f32[1,128], index: 2, kind: input, shape index: {}]
  %s3 = inlined_call_operand.hbm [shape: f32[16,128], index: 3, kind: output, shape index: {}]
  %s4 = sld [smem:[#allocation0]]
  $region65: #{_projection_layer_impl.1} parent=0
    _
  %s6 = ssub.s32 1, %s4
  %s7 = scalar_select 0, %s6, %s4
  $region1: #{_projection_layer_impl.1} parent=0
    #allocation4 [shape = 'u8[8192]{0}', space=vmem, size = 0x2000, scoped, tag = 'input window, operand 0, single buffered']
    #allocation5 [shape = 's32[2]{0}', space=sflag, size = 0x8, scoped, tag = 'scoped memory for _projection_layer_impl.1']
    #allocation6 [shape = 's32[2]{0}', space=sflag, size = 0x8, scoped, tag = 'scoped memory for _projection_layer_impl.1']
    #allocation7 [shape = 'u8[16384]{0}', space=vmem, size = 0x4000, scoped, tag = 'input window, operand 1, single buffered']
    #allocation8 [shape = 's32[1]{0}', space=sflag, size = 0x4, scoped, tag = 'scoped memory for _projection_layer_impl.1']
    #allocation9 [shape = 'u8[16384]{0}', space=vmem, size = 0x4000, scoped, tag = 'output window, operand 0']
    %8 = vsyncpa [#allocation5], 0
    %9 = vsyncpa [#allocation8], 0
    %10 = vsyncpa [#allocation6], 0
    %s11 = scalar_lea.sflag [#allocation6], 1
    %12 = vsyncpa %s11, 0
    loop: start=0, step=1, limit=4
    $region2: #{_projection_layer_impl.1} parent=1 // loop_pre_header
      _
    $region3: #{_projection_layer_impl.1} parent=1 // loop_header
      %s14 = sphi 0, %s18
      %p15 = scmp.ge.s32.totalorder %s14, 4
      %s21 = sphi 0, %s40
      %s22 = sphi 0, %s36
      %s23 = sphi 0, %s32
      %s24 = sphi 0, %s21
      %s25 = sphi 0, %s22
      %s26 = sphi 0, %s23
      %s27 = sphi 0, %s24
      %s28 = sphi 0, %s25
      %s29 = sphi 0, %s26
      %s43 = sphi 0, %s45
      %s46 = sphi 0, %s43
      %s47 = sphi 0, %s46
      %s63 = sphi 0, %s47
      %s69 = sphi 0, %s71
      %s72 = sphi 0, %s69
      %s73 = sphi 0, %s72
      %s89 = sphi 0, %s73
      %s95 = sphi 0, %s97
      %s98 = sphi 0, %s95
      %s99 = sphi 0, %s98
      %s115 = sphi 0, %s99
      %s125 = sphi 0, %s127
      %s128 = sphi 0, %s125
      %s129 = sphi 0, %s128
      %s145 = sphi 0, %s129
    $region4: #{_projection_layer_impl.1} parent=1 // loop_header_branch
      %17 = sbr.rel (%p15) target = $region8
    $region5: #{_projection_layer_impl.1} parent=1 // loop_body
      %s19 = ssub.s32 %s14, 1
      %s20 = ssub.s32 %s14, 2
      %s30 = sadd.s32 1, %s23
      %p31 = scmp.ge.s32.totalorder %s30, 1
      %s32 = scalar_select %p31, 0, %s30
      %s33 = sadd.s32 1, %s22
      %s34 = scalar_select %p31, %s33, %s22
      %p35 = scmp.ge.s32.totalorder %s34, 2
      %s36 = scalar_select %p35, 0, %s34
      %s37 = sadd.s32 1, %s21
      %s38 = scalar_select %p35, %s37, %s21
      %p39 = scmp.ge.s32.totalorder %s38, 1
      %s40 = scalar_select %p39, 0, %s38
      %s41 = ssub.s32 %s21, %s40
      %p42 = scmp.eq.s32.totalorder %s41, 0
      %s44 = sadd.s32 %s43, 1
      %s45 = scalar_select %p42, %s43, %s44
      %p48 = pneg %p42
      %p49 = scmp.eq.s32.totalorder %s14, 1
      %p50 = por %p48, %p49
      %p51 = scmp.ne.s32.totalorder %s43, %s46
      %p52 = scmp.eq.s32.totalorder %s14, 0
      %p53 = por %p51, %p52
      %p54 = scmp.ne.s32.totalorder %s43, %s46
      %p55 = scmp.eq.s32.totalorder %s19, 1
      %p56 = por %p54, %p55
      %p57 = scmp.ne.s32.totalorder %s46, %s47
      %p58 = scmp.eq.s32.totalorder %s19, 0
      %p59 = por %p57, %p58
      %p60 = scmp.ne.s32.totalorder %s46, %s47
      %p61 = scmp.eq.s32.totalorder %s20, 1
      %p62 = por %p60, %p61
      %p64 = scmp.ne.s32.totalorder %s47, %s63
      %p65 = scmp.eq.s32.totalorder %s20, 0
      %p66 = por %p64, %p65
      %s67 = ssub.s32 %s23, %s32
      %p68 = scmp.eq.s32.totalorder %s67, 0
      %s70 = sadd.s32 %s69, 1
      %s71 = scalar_select %p68, %s69, %s70
      %p74 = pneg %p68
      %p75 = scmp.eq.s32.totalorder %s14, 1
      %p76 = por %p74, %p75
      %p77 = scmp.ne.s32.totalorder %s69, %s72
      %p78 = scmp.eq.s32.totalorder %s14, 0
      %p79 = por %p77, %p78
      %p80 = scmp.ne.s32.totalorder %s69, %s72
      %p81 = scmp.eq.s32.totalorder %s19, 1
      %p82 = por %p80, %p81
      %p83 = scmp.ne.s32.totalorder %s72, %s73
      %p84 = scmp.eq.s32.totalorder %s19, 0
      %p85 = por %p83, %p84
      %p86 = scmp.ne.s32.totalorder %s72, %s73
      %p87 = scmp.eq.s32.totalorder %s20, 1
      %p88 = por %p86, %p87
      %p90 = scmp.ne.s32.totalorder %s73, %s89
      %p91 = scmp.eq.s32.totalorder %s20, 0
      %p92 = por %p90, %p91
      %s93 = ssub.s32 %s23, %s32
      %p94 = scmp.eq.s32.totalorder %s93, 0
      %s96 = sadd.s32 %s95, 1
      %s97 = scalar_select %p94, %s95, %s96
      %p100 = pneg %p94
      %p101 = scmp.eq.s32.totalorder %s14, 1
      %p102 = por %p100, %p101
      %p103 = scmp.ne.s32.totalorder %s95, %s98
      %p104 = scmp.eq.s32.totalorder %s14, 0
      %p105 = por %p103, %p104
      %p106 = scmp.ne.s32.totalorder %s95, %s98
      %p107 = scmp.eq.s32.totalorder %s19, 1
      %p108 = por %p106, %p107
      %p109 = scmp.ne.s32.totalorder %s98, %s99
      %p110 = scmp.eq.s32.totalorder %s19, 0
      %p111 = por %p109, %p110
      %p112 = scmp.ne.s32.totalorder %s98, %s99
      %p113 = scmp.eq.s32.totalorder %s20, 1
      %p114 = por %p112, %p113
      %p116 = scmp.ne.s32.totalorder %s99, %s115
      %p117 = scmp.eq.s32.totalorder %s20, 0
      %p118 = por %p116, %p117
      %s119 = smul.u32 %s23, %s22
      %s120 = smul.u32 %s32, %s36
      %s121 = ssub.s32 %s21, %s40
      %s122 = ssub.s32 %s119, %s120
      %s123 = sor.u32 %s121, %s122
      %p124 = scmp.eq.s32.totalorder %s123, 0
      %s126 = sadd.s32 %s125, 1
      %s127 = scalar_select %p124, %s125, %s126
      %p130 = pneg %p124
      %p131 = scmp.eq.s32.totalorder %s14, 1
      %p132 = por %p130, %p131
      %p133 = scmp.ne.s32.totalorder %s125, %s128
      %p134 = scmp.eq.s32.totalorder %s14, 0
      %p135 = por %p133, %p134
      %p136 = scmp.ne.s32.totalorder %s125, %s128
      %p137 = scmp.eq.s32.totalorder %s19, 1
      %p138 = por %p136, %p137
      %p139 = scmp.ne.s32.totalorder %s128, %s129
      %p140 = scmp.eq.s32.totalorder %s19, 0
      %p141 = por %p139, %p140
      %p142 = scmp.ne.s32.totalorder %s128, %s129
      %p143 = scmp.eq.s32.totalorder %s20, 1
      %p144 = por %p142, %p143
      %p146 = scmp.ne.s32.totalorder %s129, %s145
      %p147 = scmp.eq.s32.totalorder %s20, 0
      %p148 = por %p146, %p147
      %p149 = scmp.le.s32.totalorder 1, %s14
      %p150 = scmp.lt.s32.totalorder %s14, 3
      %p151 = pnand %p149, %p150
      %p152 = pneg %p151
      // Predicated region
      $region9: #{_projection_layer_impl.1} parent=5 // pred_check
        _
      $region10: #{_projection_layer_impl.1} parent=5 // pred_check_branch
        %154 = sbr.rel (%p151) target = $region12
      $region11: #{_projection_layer_impl.1} parent=5 // pred_region
        %s155 = ssub.s32 %s14, 1
        // Predicated region
        $region13: #{_projection_layer_impl.1} parent=11 // pred_check
          %p156 = pneg %p59
        $region14: #{_projection_layer_impl.1} parent=11 // pred_check_branch
          %158 = sbr.rel (%p156) target = $region16
        $region15: #{_projection_layer_impl.1} parent=11 // pred_region
          %s159 = smul.u32 2, %s24
          %161 = vsyncadd [#allocation5], 0
          %s162 = smul.addr %s159, 8
          %s163 = scalar_lea.hbm %s0, %s162
          %s164 = sshll.u32 %s163, 4
          %s165 = int_to_ptr.hbm [resolvable:$true] %s164
          %s166 = sshll.u32 [#allocation4], 4
          %s167 = int_to_ptr.vmem [resolvable:$true] %s166
          %172 = dma.hbm_to_vmem [thread:$0]  %s165, 256, %s167, [#allocation5], 128, 128, 8
        $region16: #{_projection_layer_impl.1} parent=11 // pred_fallthru
          _
        // Predicated region
        $region17: #{_projection_layer_impl.1} parent=11 // pred_check
          %p173 = pneg %p85
        $region18: #{_projection_layer_impl.1} parent=11 // pred_check_branch
          %175 = sbr.rel (%p173) target = $region20
        $region19: #{_projection_layer_impl.1} parent=11 // pred_region
          %177 = vsyncadd [#allocation8], 0
          %s178 = smul.addr %s26, 8
          %s179 = scalar_lea.hbm %s1, %s178
          %s180 = sshll.u32 %s179, 4
          %s181 = int_to_ptr.hbm [resolvable:$true] %s180
          %s182 = sshll.u32 [#allocation7], 4
          %s183 = int_to_ptr.vmem [resolvable:$true] %s182
          %188 = dma.hbm_to_vmem [thread:$0]  %s181, 512, %s183, [#allocation8], 128, 128, 8
        $region20: #{_projection_layer_impl.1} parent=11 // pred_fallthru
          _
        // Predicated region
        $region21: #{_projection_layer_impl.1} parent=11 // pred_check
          %p189 = pneg %p111
        $region22: #{_projection_layer_impl.1} parent=11 // pred_check_branch
          %191 = sbr.rel (%p189) target = $region24
        $region23: #{_projection_layer_impl.1} parent=11 // pred_region
          %p192 = scmp.lt.s32.totalorder %s26, 0
          %s193 = scalar_select %p192, %s26, 0
          %s194 = scalar_lea.vmem %s2, %s193
        $region24: #{_projection_layer_impl.1} parent=11 // pred_fallthru
          _
      $region12: #{_projection_layer_impl.1} parent=5 // pred_fallthru
        _
      %p195 = scmp.lt.s32.totalorder %s14, 2
      // Predicated region
      $region25: #{_projection_layer_impl.1} parent=5 // pred_check
        %p196 = pneg %p195
      $region26: #{_projection_layer_impl.1} parent=5 // pred_check_branch
        %198 = sbr.rel (%p196) target = $region28
      $region27: #{_projection_layer_impl.1} parent=5 // pred_region
        _
      $region28: #{_projection_layer_impl.1} parent=5 // pred_fallthru
        _
      %p199 = scmp.le.s32.totalorder 1, %s14
      %p200 = scmp.lt.s32.totalorder %s14, 3
      %p201 = pnand %p199, %p200
      %p202 = pneg %p201
      // Predicated region
      $region29: #{_projection_layer_impl.1} parent=5 // pred_check
        _
      $region30: #{_projection_layer_impl.1} parent=5 // pred_check_branch
        %204 = sbr.rel (%p201) target = $region32
      $region31: #{_projection_layer_impl.1} parent=5 // pred_region
        %s205 = ssub.s32 %s14, 1
        // Predicated region
        $region33: #{_projection_layer_impl.1} parent=31 // pred_check
          %p206 = pneg %p59
        $region34: #{_projection_layer_impl.1} parent=31 // pred_check_branch
          %208 = sbr.rel (%p206) target = $region36
        $region35: #{_projection_layer_impl.1} parent=31 // pred_region
          %210 = dma.done [#allocation5], 256
        $region36: #{_projection_layer_impl.1} parent=31 // pred_fallthru
          _
        // Predicated region
        $region37: #{_projection_layer_impl.1} parent=31 // pred_check
          %p211 = pneg %p85
        $region38: #{_projection_layer_impl.1} parent=31 // pred_check_branch
          %213 = sbr.rel (%p211) target = $region40
        $region39: #{_projection_layer_impl.1} parent=31 // pred_region
          %215 = dma.done [#allocation8], 512
        $region40: #{_projection_layer_impl.1} parent=31 // pred_fallthru
          _
        %p216 = pneg %p59
        %p217 = pneg %p56
        %p218 = pneg %p85
        %p219 = pneg %p82
        %p220 = scmp.lt.s32.totalorder %s26, 0
        %s221 = scalar_select %p220, %s26, 0
        %s222 = scalar_lea.vmem %s2, %s221
        %p223 = pneg %p111
        %p224 = pneg %p108
        %p225 = pneg %p141
        %p226 = pneg %p138
        %s227 = sand.u32 %s128, 1
        %s228 = scalar_lea.sflag [#allocation6], %s227
        %s229 = sand.u32 %s128, 1
        %s230 = smul.addr %s229, 16
        %s231 = scalar_lea.vmem [#allocation9], %s230
        %s232 = smul.u32 2, %s24
        %p233 = scmp.lt.s32.totalorder %s26, 0
        %s234 = scalar_select %p233, %s26, 0
        %s235 = scalar_lea.vmem %s2, %s234
        %s236 = smul.u32 %s26, %s25
        %s237 = smul.u32 2, %s24
        %p238 = scmp.eq.s32.totalorder %s25, 0
        %p239 = scmp.eq.s32.totalorder %s26, 0
        %p240 = pnand %p238, %p239
        %p241 = pneg %p240
        // Predicated region
        $region41: #{_projection_layer_impl.1} parent=31 // pred_check
          _
        $region42: #{_projection_layer_impl.1} parent=31 // pred_check_branch
          %243 = sbr.rel (%p240) target = $region44
        $region43: #{_projection_layer_impl.1} parent=31 // pred_region
          %vm244 = vcmask 7168
          %245 = vst.msk [vmem:[#allocation2] sm:$0xff] %vm244, -inf
          %246 = vst.msk [vmem:[#allocation2 + $0x8] sm:$0xff] %vm244, -inf
          %247 = vst.msk [vmem:[#allocation3] sm:$0xff] %vm244, 0.0
          %248 = vst.msk [vmem:[#allocation3 + $0x8] sm:$0xff] %vm244, 0.0
        $region44: #{_projection_layer_impl.1} parent=31 // pred_fallthru
          _
        %v249 = vld [vmem:[#allocation4] sm:$0xff]
        %v250 = vld [vmem:[#allocation4 + $0x8] sm:$0xff]
        %v251 = vld [vmem:[#allocation7] sm:$0xff]
        %v252 = vld [vmem:[#allocation7 + $0x8] sm:$0xff]
        %v253 = vld [vmem:[#allocation7 + $0x10] sm:$0xff]
        %v254 = vld [vmem:[#allocation7 + $0x18] sm:$0xff]
        %v255 = vld [vmem:[%s235] sm:$0x1]
        %v257 = vperm.slane %v255, 0
        %vm259 = vcmask 261120
        %v261 = vsel %vm259, %v249, 0
        %v264 = vsel %vm259, %v250, 0
        %266 = vmatpush.msra.mxu0 0.0
        %267 = vmatpush.msra.mxu0 0.0
        %268 = vmatpush.msra.mxu0 0.0
        %269 = vmatpush.msra.mxu0 0.0
        %270 = vmatpush.msra.mxu0 0.0
        %271 = vmatpush.msra.mxu0 0.0
        %272 = vmatpush.msra.mxu0 0.0
        %273 = vmatpush.msra.mxu0 0.0
        %274 = vmatpush.msra.mxu0 0.0
        %275 = vmatpush.msra.mxu0 0.0
        %276 = vmatpush.msra.mxu0 0.0
        %277 = vmatpush.msra.mxu0 0.0
        %278 = vmatpush.msra.mxu0 %v254
        %279 = vmatpush.msra.mxu0 %v253
        %280 = vmatpush.msra.mxu0 %v252
        %281 = vmatpush.msra.mxu0 %v251
        %282 = vmatmul.f32.gmra.mxu0 %v261
        %v283 = vpop.f32.mrf.mxu0
        %v284 = vadd.f32 %v257, %v283
        %285 = vmatmul.f32.gmra.mxu0 %v264
        %v286 = vpop.f32.mrf.mxu0
        %v287 = vadd.f32 %v257, %v286
        %288 = vdwg.mxu0
        // Predicated region
        $region45: #{_projection_layer_impl.1} parent=31 // pred_check
          %p289 = pneg %p238
        $region46: #{_projection_layer_impl.1} parent=31 // pred_check_branch
          %291 = sbr.rel (%p289) target = $region48
        $region47: #{_projection_layer_impl.1} parent=31 // pred_region
          %v292 = vld [vmem:[#allocation2] sm:$0xff]
          %v293 = vld [vmem:[#allocation2 + $0x8] sm:$0xff]
          %294 = vmax.xlane.f32.xlu0 %v284
          %v295 = vpop.xlane.xlu0 %294
          %296 = vmax.xlane.f32.xlu0 %v287
          %v297 = vpop.xlane.xlu0 %296
          %v298 = vmax.f32 %v292, %v295
          %v299 = vmax.f32 %v293, %v297
          %v300 = vld [vmem:[#allocation3] sm:$0xff]
          %v301 = vld [vmem:[#allocation3 + $0x8] sm:$0xff]
          %v302 = vsub.f32 %v292, %v298
          %v303 = vsub.f32 %v293, %v299
          %v304 = vmul.f32 %v302, 1.442695
          %v305 = vpow.pop %v304
          %v306 = vmul.f32 %v303, 1.442695
          %v307 = vpow.pop %v306
          %v308 = vmul.f32 %v300, %v305
          %v309 = vmul.f32 %v301, %v307
          %311 = vset.pattern.permute.xlu0 0
          %312 = vperm.xlu0 %311, %v298
          %v313 = vpop.permute.xlu0 %312
          %316 = vset.pattern.permute.xlu0 0
          %317 = vperm.xlu0 %316, %v299
          %v318 = vpop.permute.xlu0 %317
          %v320 = vsub.f32 %v284, %v313
          %v321 = vsub.f32 %v287, %v318
          %v322 = vmul.f32 %v320, 1.442695
          %v323 = vpow.pop %v322
          %v324 = vmul.f32 %v321, 1.442695
          %v325 = vpow.pop %v324
          %326 = vadd.xlane.f32.xlu0 %v323
          %v327 = vpop.xlane.xlu0 %326
          %328 = vadd.xlane.f32.xlu0 %v325
          %v329 = vpop.xlane.xlu0 %328
          %v330 = vadd.f32 %v308, %v327
          %v331 = vadd.f32 %v309, %v329
          %vm332 = vcmask 7168
          %333 = vst.msk [vmem:[#allocation3] sm:$0xff] %vm332, %v330
          %334 = vst.msk [vmem:[#allocation3 + $0x8] sm:$0xff] %vm332, %v331
          %335 = vst.msk [vmem:[#allocation2] sm:$0xff] %vm332, %v298
          %336 = vst.msk [vmem:[#allocation2 + $0x8] sm:$0xff] %vm332, %v299
        $region48: #{_projection_layer_impl.1} parent=31 // pred_fallthru
          _
        %p337 = scmp.eq.s32.totalorder %s25, 1
        // Predicated region
        $region49: #{_projection_layer_impl.1} parent=31 // pred_check
          %p338 = pneg %p337
        $region50: #{_projection_layer_impl.1} parent=31 // pred_check_branch
          %340 = sbr.rel (%p338) target = $region52
        $region51: #{_projection_layer_impl.1} parent=31 // pred_region
          %v341 = vld [vmem:[#allocation2] sm:$0xff]
          %v342 = vld [vmem:[#allocation2 + $0x8] sm:$0xff]
          %v343 = vld [vmem:[#allocation3] sm:$0xff]
          %v344 = vld [vmem:[#allocation3 + $0x8] sm:$0xff]
          %v345 = vlog2.pop %v343
          %v346 = vmul.f32 %v345, 0.6931472
          %v347 = vlog2.pop %v344
          %v348 = vmul.f32 %v347, 0.6931472
          %v349 = vadd.f32 %v341, %v346
          %v350 = vadd.f32 %v342, %v348
          %352 = vset.pattern.permute.xlu0 0
          %353 = vperm.xlu0 %352, %v349
          %v354 = vpop.permute.xlu0 %353
          %357 = vset.pattern.permute.xlu0 0
          %358 = vperm.xlu0 %357, %v350
          %v359 = vpop.permute.xlu0 %358
          %v361 = vsub.f32 %v284, %v354
          %v362 = vsub.f32 %v287, %v359
          %363 = vst [vmem:[%s231] sm:$0xff] %v361
          %364 = vst [vmem:[%s231 + $0x8] sm:$0xff] %v362
        $region52: #{_projection_layer_impl.1} parent=31 // pred_fallthru
          _
        %s365 = sand.u32 %s128, 1
        %s366 = scalar_lea.sflag [#allocation6], %s365
        %s367 = sand.u32 %s128, 1
        %s368 = smul.addr %s367, 16
        %s369 = scalar_lea.vmem [#allocation9], %s368
        // Predicated region
        $region53: #{_projection_layer_impl.1} parent=31 // pred_check
          %p370 = pneg %p138
        $region54: #{_projection_layer_impl.1} parent=31 // pred_check_branch
          %372 = sbr.rel (%p370) target = $region56
        $region55: #{_projection_layer_impl.1} parent=31 // pred_region
          %s373 = smul.u32 %s26, %s25
          %s374 = smul.u32 2, %s24
          %376 = vsyncadd %s366, 0
          %s377 = sadd.s32 %s373, %s374
          %s378 = smul.addr %s377, 8
          %s379 = scalar_lea.hbm %s3, %s378
          %s380 = sshll.u32 %s369, 4
          %s381 = int_to_ptr.vmem [resolvable:$true] %s380
          %s382 = sshll.u32 %s379, 4
          %s383 = int_to_ptr.hbm [resolvable:$true] %s382
          %388 = dma.vmem_to_hbm [thread:$0]  %s381, 256, %s383, %s366, 128, 128, 8
        $region56: #{_projection_layer_impl.1} parent=31 // pred_fallthru
          _
      $region32: #{_projection_layer_impl.1} parent=5 // pred_fallthru
        _
      %p389 = scmp.le.s32.totalorder 2, %s14
      // Predicated region
      $region57: #{_projection_layer_impl.1} parent=5 // pred_check
        %p390 = pneg %p389
      $region58: #{_projection_layer_impl.1} parent=5 // pred_check_branch
        %392 = sbr.rel (%p390) target = $region60
      $region59: #{_projection_layer_impl.1} parent=5 // pred_region
        %s393 = ssub.s32 %s14, 2
        // Predicated region
        $region61: #{_projection_layer_impl.1} parent=59 // pred_check
          %p394 = pneg %p144
        $region62: #{_projection_layer_impl.1} parent=59 // pred_check_branch
          %396 = sbr.rel (%p394) target = $region64
        $region63: #{_projection_layer_impl.1} parent=59 // pred_region
          %s397 = sand.u32 %s129, 1
          %s398 = scalar_lea.sflag [#allocation6], %s397
          %s399 = sand.u32 %s129, 1
          %s400 = smul.addr %s399, 16
          %s401 = scalar_lea.vmem [#allocation9], %s400
          %403 = dma.done %s398, 256
        $region64: #{_projection_layer_impl.1} parent=59 // pred_fallthru
          _
      $region60: #{_projection_layer_impl.1} parent=5 // pred_fallthru
        _
    $region6: #{_projection_layer_impl.1} parent=1 // loop_footer
      %s18 = sadd.s32 1, %s14
    $region7: #{_projection_layer_impl.1} parent=1 // loop_footer_branch
      %13 = sbr.rel target = $region3
    $region8: #{_projection_layer_impl.1} parent=1 // loop_exit
      _
    %404 = vsyncpa [#allocation5], 1
    %s405 = scalar_lea.sflag [#allocation5], 1
    %406 = vsyncpa %s405, 1
    %407 = vsyncpa [#allocation8], 1
    %408 = vsyncpa [#allocation6], 1
    %s409 = scalar_lea.sflag [#allocation6], 1
    %410 = vsyncpa %s409, 1

</llo_original>
